<compile_context>
chip_gen: v7x
topology: tpu7x:2x2x1
jax: 0.10.0
libtpu: 0.0.40
codegen_flags: <defaults>
</compile_context>

<pallas_src>
import functools

import jax
import jax.numpy as jnp
from jax.experimental import pallas as pl
from jax.experimental.pallas import tpu as pltpu

_LANE = 128
_BF16_SUBLANE = 16      # bf16 vreg is (16, 128); round batch tiles to this
_MIN_SPLIT = 256        # once padded batch >= 2*_MIN_SPLIT, force >=2 grid steps


def _round_up(x, m):
    return (x + m - 1) // m * m


def _cdiv(a, b):
    return (a + b - 1) // b


def _pad2(a, rows, cols, dtype):
    r, c = a.shape
    return jnp.pad(a.astype(dtype), ((0, rows - r), (0, cols - c)))


def _actor_kernel(x_ref, w1_ref, b1_ref, w2_ref, b2_ref, w3_ref, b3_ref,
                  o_ref, *, max_action):
    # Fused x cast: f32 tile from HBM -> bf16 for the MXU (no wrapper pass).
    x = x_ref[...].astype(jnp.bfloat16)

    # Layer 1: bf16 @ bf16 on the MXU, f32 accumulation; bias/ReLU in f32.
    h1 = jnp.dot(x, w1_ref[...], preferred_element_type=jnp.float32)
    h1 = jnp.maximum(h1 + b1_ref[...], 0.0)

    # Layer 2.
    h2 = jnp.dot(h1.astype(jnp.bfloat16), w2_ref[...],
                 preferred_element_type=jnp.float32)
    h2 = jnp.maximum(h2 + b2_ref[...], 0.0)

    # Layer 3 + max_action * tanh (f32 elementwise / EUP path).
    h3 = jnp.dot(h2.astype(jnp.bfloat16), w3_ref[...],
                 preferred_element_type=jnp.float32)
    o_ref[...] = (max_action * jnp.tanh(h3 + b3_ref[...])).astype(o_ref.dtype)


def prepare_actor_params(params):
    """One-time (per weight update) padding + bf16 cast of the Actor weights.

    Weights: bf16, output-feature dims lane-padded to multiples of 128; the
    input-feature dim of w1 stays unpadded (matches the unpadded x block).
    Biases: f32, lane-padded.
    """
    w1, b1 = params["w1"], params["b1"]
    w2, b2 = params["w2"], params["b2"]
    w3, b3 = params["w3"], params["b3"]

    state_dim, h1_dim = w1.shape
    h2_dim = w2.shape[1]
    action_dim = w3.shape[1]

    h1_p = _round_up(h1_dim, _LANE)      # 400 -> 512
    h2_p = _round_up(h2_dim, _LANE)      # 300 -> 384
    a_p = _round_up(action_dim, _LANE)   # A   -> 128

    return {
        "w1": _pad2(w1, state_dim, h1_p, jnp.bfloat16),
        "b1": _pad2(b1, 1, h1_p, jnp.float32),
        "w2": _pad2(w2, h1_p, h2_p, jnp.bfloat16),
        "b2": _pad2(b2, 1, h2_p, jnp.float32),
        "w3": _pad2(w3, h2_p, a_p, jnp.bfloat16),
        "b3": _pad2(b3, 1, a_p, jnp.float32),
    }


@functools.partial(jax.jit,
                   static_argnames=("action_dim", "max_action", "block_batch"))
def actor_forward(x, prepared, action_dim, max_action, block_batch=1024):
    """Actor forward pass as a single batch-tiled Pallas kernel.

    x:        [batch, state_dim] float32 (unpadded).
    prepared: output of prepare_actor_params (pre-padded bf16 weights).
    """
    w1, b1 = prepared["w1"], prepared["b1"]
    w2, b2 = prepared["w2"], prepared["b2"]
    w3, b3 = prepared["w3"], prepared["b3"]

    batch, state_dim = x.shape
    h1_p = w1.shape[1]
    h2_p = w2.shape[1]
    a_p = w3.shape[1]

    # Batch tiling: round to bf16 sublane packing (16); cap at block_batch
    # (v5e-safe VMEM at 1024); for large batches ensure >= 2 grid steps so the
    # "parallel" axis can shard across v7x's 2 TensorCores.
    b16 = _round_up(batch, _BF16_SUBLANE)
    bt = min(block_batch, b16)
    if b16 >= 2 * _MIN_SPLIT:
        bt = min(bt, _round_up(_cdiv(b16, 2), _BF16_SUBLANE))
    b_p = _round_up(b16, bt)
    n_tiles = b_p // bt

    # Only the batch dim of x may need padding (feature dim stays unpadded:
    # block last dim == full array dim is legal).
    xp = x if b_p == batch else jnp.pad(x, ((0, b_p - batch), (0, 0)))

    const = lambda shape: pl.BlockSpec(shape, lambda i: (0, 0))

    flops = 2 * b_p * (state_dim * h1_p + h1_p * h2_p + h2_p * a_p)
    bytes_accessed = (
        xp.size * 4                                       # f32 x stream
        + (w1.size + w2.size + w3.size) * 2               # bf16 weights
        + (b1.size + b2.size + b3.size) * 4               # f32 biases
        + b_p * a_p * 4)                                  # f32 output

    kernel = functools.partial(_actor_kernel, max_action=float(max_action))

    out = pl.pallas_call(
        kernel,
        out_shape=jax.ShapeDtypeStruct((b_p, a_p), jnp.float32),
        grid=(n_tiles,),
        in_specs=[
            pl.BlockSpec((bt, state_dim), lambda i: (i, 0)),  # x: batch-tiled
            const((state_dim, h1_p)), const((1, h1_p)),       # w1, b1 resident
            const((h1_p, h2_p)), const((1, h2_p)),            # w2, b2
            const((h2_p, a_p)), const((1, a_p)),              # w3, b3
        ],
        out_specs=pl.BlockSpec((bt, a_p), lambda i: (i, 0)),
        compiler_params=pltpu.CompilerParams(
            dimension_semantics=("parallel",)),
        cost_estimate=pl.CostEstimate(
            flops=flops,
            transcendentals=b_p * a_p,
            bytes_accessed=bytes_accessed),
    )(xp, w1, b1, w2, b2, w3, b3)

    # Strip the batch / lane padding.
    return out[:batch, :action_dim]


def init_actor_params(key, state_dim, action_dim):
    """PyTorch nn.Linear-style init: U(-1/sqrt(fan_in), +1/sqrt(fan_in))."""
    dims = [(state_dim, 400), (400, 300), (300, action_dim)]
    params = {}
    for i, (fan_in, fan_out) in enumerate(dims, start=1):
        key, kw, kb = jax.random.split(key, 3)
        bound = 1.0 / jnp.sqrt(jnp.float32(fan_in))
        params[f"w{i}"] = jax.random.uniform(
            kw, (fan_in, fan_out), jnp.float32, minval=-bound, maxval=bound)
        params[f"b{i}"] = jax.random.uniform(
            kb, (1, fan_out), jnp.float32, minval=-bound, maxval=bound)
    return params


def actor_reference(x, params, max_action):
    """Pure-JAX f32 reference for correctness check."""
    h = jnp.maximum(x @ params["w1"] + params["b1"], 0.0)
    h = jnp.maximum(h @ params["w2"] + params["b2"], 0.0)
    return max_action * jnp.tanh(h @ params["w3"] + params["b3"])


if __name__ == "__main__":
    batch, state_dim, action_dim = 2, 16, 4
    max_action = 2.0

    key = jax.random.PRNGKey(0)
    key, kx = jax.random.split(key)
    x = jax.random.normal(kx, (batch, state_dim), jnp.float32)
    params = init_actor_params(key, state_dim, action_dim)

    # One-time weight prep (re-run only when the weights change).
    prepared = prepare_actor_params(params)

    out = actor_forward(x, prepared, action_dim=action_dim,
                        max_action=max_action)
    out = jax.block_until_ready(out)

    ref = actor_reference(x, params, max_action)
    assert out.shape == (batch, action_dim)
    # bf16 weight/activation streams -> loosened tolerance vs the f32 reference.
    assert jnp.allclose(out, ref, atol=5e-2, rtol=5e-2), "mismatch vs reference"

    print("KERNEL_OK")
</pallas_src>

<mosaic_0001>
module attributes {stable_mosaic.version = 11 : i64} {
  func.func @_actor_kernel(%arg0: i32, %arg1: memref<16x16xf32, #tpu.memory_space<vmem>>, %arg2: memref<16x512xbf16, #tpu.memory_space<vmem>>, %arg3: memref<1x512xf32, #tpu.memory_space<vmem>>, %arg4: memref<512x384xbf16, #tpu.memory_space<vmem>>, %arg5: memref<1x384xf32, #tpu.memory_space<vmem>>, %arg6: memref<384x128xbf16, #tpu.memory_space<vmem>>, %arg7: memref<1x128xf32, #tpu.memory_space<vmem>>, %arg8: memref<16x128xf32, #tpu.memory_space<vmem>>) attributes {dimension_semantics = [#tpu.dimension_semantics<parallel>], iteration_bounds = array<i64: 1>, scalar_prefetch = 0 : i64, scratch_operands = 0 : i64, tpu.core_type = #tpu.core_type<tc>, window_params = [{transform_indices = @transform_0, window_bounds = array<i64: 16, 16>}, {pipeline_mode = #tpu.pipeline_mode<synchronous>, transform_indices = @transform_1, window_bounds = array<i64: 16, 512>}, {pipeline_mode = #tpu.pipeline_mode<synchronous>, transform_indices = @transform_2, window_bounds = array<i64: 1, 512>}, {pipeline_mode = #tpu.pipeline_mode<synchronous>, transform_indices = @transform_3, window_bounds = array<i64: 512, 384>}, {pipeline_mode = #tpu.pipeline_mode<synchronous>, transform_indices = @transform_4, window_bounds = array<i64: 1, 384>}, {pipeline_mode = #tpu.pipeline_mode<synchronous>, transform_indices = @transform_5, window_bounds = array<i64: 384, 128>}, {pipeline_mode = #tpu.pipeline_mode<synchronous>, transform_indices = @transform_6, window_bounds = array<i64: 1, 128>}, {transform_indices = @transform_7, window_bounds = array<i64: 16, 128>}]} {
    %c0 = arith.constant 0 : index
    %c0_0 = arith.constant 0 : index
    %0 = vector.load %arg1[%c0, %c0_0] : memref<16x16xf32, #tpu.memory_space<vmem>>, vector<16x16xf32>
    %1 = arith.truncf %0 : vector<16x16xf32> to vector<16x16xbf16>
    %c0_1 = arith.constant 0 : index
    %c0_2 = arith.constant 0 : index
    %2 = vector.load %arg2[%c0_1, %c0_2] : memref<16x512xbf16, #tpu.memory_space<vmem>>, vector<16x512xbf16>
    %cst = arith.constant dense<0.000000e+00> : vector<16x512xf32>
    %3 = tpu.matmul %1, %2, %cst {dimension_numbers = #tpu.dot_dimension_numbers<[1], [0], [0], [1], [0, 0, 1, 1], [], []>} : vector<16x16xbf16>, vector<16x512xbf16>, vector<16x512xf32> -> vector<16x512xf32>
    %c0_3 = arith.constant 0 : index
    %c0_4 = arith.constant 0 : index
    %4 = vector.load %arg3[%c0_3, %c0_4] : memref<1x512xf32, #tpu.memory_space<vmem>>, vector<1x512xf32>
    %5 = vector.broadcast %4 : vector<1x512xf32> to vector<16x512xf32>
    %6 = arith.addf %3, %5 : vector<16x512xf32>
    %cst_5 = arith.constant 0.000000e+00 : f32
    %7 = vector.broadcast %cst_5 : f32 to vector<16x512xf32>
    %8 = arith.maximumf %6, %7 : vector<16x512xf32>
    %9 = arith.truncf %8 : vector<16x512xf32> to vector<16x512xbf16>
    %c0_6 = arith.constant 0 : index
    %c0_7 = arith.constant 0 : index
    %10 = vector.load %arg4[%c0_6, %c0_7] : memref<512x384xbf16, #tpu.memory_space<vmem>>, vector<512x384xbf16>
    %cst_8 = arith.constant dense<0.000000e+00> : vector<16x384xf32>
    %11 = tpu.matmul %9, %10, %cst_8 {dimension_numbers = #tpu.dot_dimension_numbers<[1], [0], [0], [1], [0, 0, 1, 1], [], []>} : vector<16x512xbf16>, vector<512x384xbf16>, vector<16x384xf32> -> vector<16x384xf32>
    %c0_9 = arith.constant 0 : index
    %c0_10 = arith.constant 0 : index
    %12 = vector.load %arg5[%c0_9, %c0_10] : memref<1x384xf32, #tpu.memory_space<vmem>>, vector<1x384xf32>
    %13 = vector.broadcast %12 : vector<1x384xf32> to vector<16x384xf32>
    %14 = arith.addf %11, %13 : vector<16x384xf32>
    %cst_11 = arith.constant 0.000000e+00 : f32
    %15 = vector.broadcast %cst_11 : f32 to vector<16x384xf32>
    %16 = arith.maximumf %14, %15 : vector<16x384xf32>
    %17 = arith.truncf %16 : vector<16x384xf32> to vector<16x384xbf16>
    %c0_12 = arith.constant 0 : index
    %c0_13 = arith.constant 0 : index
    %18 = vector.load %arg6[%c0_12, %c0_13] : memref<384x128xbf16, #tpu.memory_space<vmem>>, vector<384x128xbf16>
    %cst_14 = arith.constant dense<0.000000e+00> : vector<16x128xf32>
    %19 = tpu.matmul %17, %18, %cst_14 {dimension_numbers = #tpu.dot_dimension_numbers<[1], [0], [0], [1], [0, 0, 1, 1], [], []>} : vector<16x384xbf16>, vector<384x128xbf16>, vector<16x128xf32> -> vector<16x128xf32>
    %c0_15 = arith.constant 0 : index
    %c0_16 = arith.constant 0 : index
    %20 = vector.load %arg7[%c0_15, %c0_16] : memref<1x128xf32, #tpu.memory_space<vmem>>, vector<1x128xf32>
    %21 = vector.broadcast %20 : vector<1x128xf32> to vector<16x128xf32>
    %22 = arith.addf %19, %21 : vector<16x128xf32>
    %23 = math.tanh %22 : vector<16x128xf32>
    %cst_17 = arith.constant 2.000000e+00 : f32
    %24 = vector.broadcast %cst_17 : f32 to vector<16x128xf32>
    %25 = arith.mulf %24, %23 : vector<16x128xf32>
    %c0_18 = arith.constant 0 : index
    %c0_19 = arith.constant 0 : index
    %26 = vector.load %arg8[%c0_18, %c0_19] : memref<16x128xf32, #tpu.memory_space<vmem>>, vector<16x128xf32>
    tpu.vector_store %arg8[%c0_18, %c0_19], %25 {strides = array<i32>} : memref<16x128xf32, #tpu.memory_space<vmem>>, vector<16x128xf32>,
    return
  }
  func.func @transform_0(%arg0: i32) -> (i32, i32) {
    %c0_i32 = arith.constant 0 : i32
    %c0_i32_0 = arith.constant 0 : i32
    return %arg0, %c0_i32 : i32, i32
  }
  func.func @transform_1(%arg0: i32) -> (i32, i32) {
    %c0_i32 = arith.constant 0 : i32
    %c0_i32_0 = arith.constant 0 : i32
    %c0_i32_1 = arith.constant 0 : i32
    return %c0_i32, %c0_i32_0 : i32, i32
  }
  func.func @transform_2(%arg0: i32) -> (i32, i32) {
    %c0_i32 = arith.constant 0 : i32
    %c0_i32_0 = arith.constant 0 : i32
    %c0_i32_1 = arith.constant 0 : i32
    return %c0_i32, %c0_i32_0 : i32, i32
  }
  func.func @transform_3(%arg0: i32) -> (i32, i32) {
    %c0_i32 = arith.constant 0 : i32
    %c0_i32_0 = arith.constant 0 : i32
    %c0_i32_1 = arith.constant 0 : i32
    return %c0_i32, %c0_i32_0 : i32, i32
  }
  func.func @transform_4(%arg0: i32) -> (i32, i32) {
    %c0_i32 = arith.constant 0 : i32
    %c0_i32_0 = arith.constant 0 : i32
    %c0_i32_1 = arith.constant 0 : i32
    return %c0_i32, %c0_i32_0 : i32, i32
  }
  func.func @transform_5(%arg0: i32) -> (i32, i32) {
    %c0_i32 = arith.constant 0 : i32
    %c0_i32_0 = arith.constant 0 : i32
    %c0_i32_1 = arith.constant 0 : i32
    return %c0_i32, %c0_i32_0 : i32, i32
  }
  func.func @transform_6(%arg0: i32) -> (i32, i32) {
    %c0_i32 = arith.constant 0 : i32
    %c0_i32_0 = arith.constant 0 : i32
    %c0_i32_1 = arith.constant 0 : i32
    return %c0_i32, %c0_i32_0 : i32, i32
  }
  func.func @transform_7(%arg0: i32) -> (i32, i32) {
    %c0_i32 = arith.constant 0 : i32
    %c0_i32_0 = arith.constant 0 : i32
    return %arg0, %c0_i32 : i32, i32
  }
}

</mosaic_0001>

<llo_original>
// kernel: actor_forward.1
$region0: #{actor_forward.1}
  #allocation0 [shape = 'u32[]', space=smem, size = 0x4, offset = 0x4, fixed_abs, tag = 'smem constant byte address 0x4 - core index']
  #allocation1 [shape = 'u32[144,128]{1,0:T(1,128)}', space=vmem, size = 0x12000, scoped, tag = 'internal scratch']
  %s0 = inlined_call_operand.vmem [shape: f32[16,16], index: 0, kind: input, shape index: {}]
  %s1 = inlined_call_operand.vmem [shape: bf16[16,512], index: 1, kind: input, shape index: {}]
  %s2 = inlined_call_operand.hbm [shape: f32[1,512], index: 2, kind: input, shape index: {}]
  %s3 = inlined_call_operand.hbm [shape: bf16[512,384], index: 3, kind: input, shape index: {}]
  %s4 = inlined_call_operand.hbm [shape: f32[1,384], index: 4, kind: input, shape index: {}]
  %s5 = inlined_call_operand.hbm [shape: bf16[384,128], index: 5, kind: input, shape index: {}]
  %s6 = inlined_call_operand.vmem [shape: f32[1,128], index: 6, kind: input, shape index: {}]
  %s7 = inlined_call_operand.vmem [shape: f32[16,128], index: 7, kind: output, shape index: {}]
  %s8 = sld [smem:[#allocation0]]
  $region54: #{actor_forward.1} parent=0
    _
  %s10 = ssub.s32 1, %s8
  %s11 = scalar_select 0, %s10, %s8
  $region1: #{actor_forward.1} parent=0
    #allocation2 [shape = 'u8[2048]{0}', space=vmem, size = 0x800, scoped, tag = 'input window, operand 2, single buffered']
    #allocation3 [shape = 's32[1]{0}', space=sflag, size = 0x4, scoped, tag = 'scoped memory for actor_forward.1']
    #allocation4 [shape = 'u8[393216]{0}', space=vmem, size = 0x60000, scoped, tag = 'input window, operand 3, single buffered']
    #allocation5 [shape = 's32[1]{0}', space=sflag, size = 0x4, scoped, tag = 'scoped memory for actor_forward.1']
    #allocation6 [shape = 'u8[1536]{0}', space=vmem, size = 0x800, scoped, tag = 'input window, operand 4, single buffered']
    #allocation7 [shape = 'u8[98304]{0}', space=vmem, size = 0x18000, scoped, tag = 'input window, operand 5, single buffered']
    #allocation8 [shape = 's32[1]{0}', space=sflag, size = 0x4, scoped, tag = 'scoped memory for actor_forward.1']
    %12 = vsyncpa [#allocation3], 0
    %13 = vsyncpa [#allocation5], 0
    %14 = vsyncpa [#allocation8], 0
    // Predicated region
    $region2: #{actor_forward.1} parent=1 // pred_check
      _
    $region3: #{actor_forward.1} parent=1 // pred_check_branch
      %16 = sbr.rel (0) target = $region5
    $region4: #{actor_forward.1} parent=1 // pred_region
      _
    $region5: #{actor_forward.1} parent=1 // pred_fallthru
      _
    // Predicated region
    $region6: #{actor_forward.1} parent=1 // pred_check
      _
    $region7: #{actor_forward.1} parent=1 // pred_check_branch
      %18 = sbr.rel (0) target = $region9
    $region8: #{actor_forward.1} parent=1 // pred_region
      _
    $region9: #{actor_forward.1} parent=1 // pred_fallthru
      _
    // Predicated region
    $region10: #{actor_forward.1} parent=1 // pred_check
      _
    $region11: #{actor_forward.1} parent=1 // pred_check_branch
      %20 = sbr.rel (0) target = $region13
    $region12: #{actor_forward.1} parent=1 // pred_region
      %s22 = ssub.s32 64, 64
      %23 = vsyncadd [#allocation3], %s22
      %s25 = sshll.u32 [#allocation2], 4
      %s26 = int_to_ptr.vmem [resolvable:$true] %s25
      %28 = dma.hbm_to_vmem [thread:$0]  %s2, 64, %s26, [#allocation3]
    $region13: #{actor_forward.1} parent=1 // pred_fallthru
      _
    // Predicated region
    $region14: #{actor_forward.1} parent=1 // pred_check
      _
    $region15: #{actor_forward.1} parent=1 // pred_check_branch
      %30 = sbr.rel (0) target = $region17
    $region16: #{actor_forward.1} parent=1 // pred_region
      %s32 = ssub.s32 12288, 12288
      %33 = vsyncadd [#allocation5], %s32
      %s34 = sshll.u32 [#allocation4], 4
      %s35 = int_to_ptr.vmem [resolvable:$true] %s34
      %40 = dma.hbm_to_vmem [thread:$0]  %s3, 12288, %s35, [#allocation5], 192, 192, 12
    $region17: #{actor_forward.1} parent=1 // pred_fallthru
      _
    // Predicated region
    $region18: #{actor_forward.1} parent=1 // pred_check
      _
    $region19: #{actor_forward.1} parent=1 // pred_check_branch
      %42 = sbr.rel (0) target = $region21
    $region20: #{actor_forward.1} parent=1 // pred_region
      %s44 = ssub.s32 48, 48
      %45 = vsyncadd [#allocation5], %s44
      %s47 = sshll.u32 [#allocation6], 4
      %s48 = int_to_ptr.vmem [resolvable:$true] %s47
      %50 = dma.hbm_to_vmem [thread:$0]  %s4, 48, %s48, [#allocation5]
    $region21: #{actor_forward.1} parent=1 // pred_fallthru
      _
    // Predicated region
    $region22: #{actor_forward.1} parent=1 // pred_check
      _
    $region23: #{actor_forward.1} parent=1 // pred_check_branch
      %52 = sbr.rel (0) target = $region25
    $region24: #{actor_forward.1} parent=1 // pred_region
      %s54 = ssub.s32 3072, 3072
      %55 = vsyncadd [#allocation8], %s54
      %s56 = sshll.u32 [#allocation7], 4
      %s57 = int_to_ptr.vmem [resolvable:$true] %s56
      %62 = dma.hbm_to_vmem [thread:$0]  %s5, 3072, %s57, [#allocation8], 64, 64, 4
    $region25: #{actor_forward.1} parent=1 // pred_fallthru
      _
    // Predicated region
    $region26: #{actor_forward.1} parent=1 // pred_check
      _
    $region27: #{actor_forward.1} parent=1 // pred_check_branch
      %64 = sbr.rel (0) target = $region29
    $region28: #{actor_forward.1} parent=1 // pred_region
      _
    $region29: #{actor_forward.1} parent=1 // pred_fallthru
      _
    // Predicated region
    $region30: #{actor_forward.1} parent=1 // pred_check
      _
    $region31: #{actor_forward.1} parent=1 // pred_check_branch
      %66 = sbr.rel (0) target = $region33
    $region32: #{actor_forward.1} parent=1 // pred_region
      %67 = dma.done [#allocation3], 64
    $region33: #{actor_forward.1} parent=1 // pred_fallthru
      _
    // Predicated region
    $region34: #{actor_forward.1} parent=1 // pred_check
      _
    $region35: #{actor_forward.1} parent=1 // pred_check_branch
      %69 = sbr.rel (0) target = $region37
    $region36: #{actor_forward.1} parent=1 // pred_region
      %70 = dma.done [#allocation5], 12288
    $region37: #{actor_forward.1} parent=1 // pred_fallthru
      _
    // Predicated region
    $region38: #{actor_forward.1} parent=1 // pred_check
      _
    $region39: #{actor_forward.1} parent=1 // pred_check_branch
      %72 = sbr.rel (0) target = $region41
    $region40: #{actor_forward.1} parent=1 // pred_region
      %73 = dma.done [#allocation5], 48
    $region41: #{actor_forward.1} parent=1 // pred_fallthru
      _
    // Predicated region
    $region42: #{actor_forward.1} parent=1 // pred_check
      _
    $region43: #{actor_forward.1} parent=1 // pred_check_branch
      %75 = sbr.rel (0) target = $region45
    $region44: #{actor_forward.1} parent=1 // pred_region
      %76 = dma.done [#allocation8], 3072
    $region45: #{actor_forward.1} parent=1 // pred_fallthru
      _
    %v78 = vld [vmem:[%s0] sm:$0xff]
    %v79 = vld [vmem:[%s0 + $0x8] sm:$0xff]
    %v80 = vpack.c.bf16 %v79, %v78
    %v81 = vld [vmem:[%s1] sm:$0xff]
    %v82 = vld [vmem:[%s1 + $0x8] sm:$0xff]
    %v83 = vld [vmem:[%s1 + $0x10] sm:$0xff]
    %v84 = vld [vmem:[%s1 + $0x18] sm:$0xff]
    %v85 = vld [vmem:[#allocation2] sm:$0xf]
    %v87 = vlaneseq
    %v88 = vshrl.u32 %v87, 7
    %v89 = vsub.s32 0, %v88
    %v90 = vrot.slane %v85, %v89
    %v91 = vlaneseq
    %v92 = vshrl.u32 %v91, 7
    %v93 = vsub.s32 1, %v92
    %v94 = vrot.slane %v85, %v93
    %v95 = vlaneseq
    %v96 = vshrl.u32 %v95, 7
    %v97 = vsub.s32 2, %v96
    %v98 = vrot.slane %v85, %v97
    %v99 = vlaneseq
    %v100 = vshrl.u32 %v99, 7
    %v101 = vsub.s32 3, %v100
    %v102 = vrot.slane %v85, %v101
    %v111 = vunpack.c.l.b16 %v81
    %v112 = vunpack.c.h.b16 %v81
    %v113 = vunpack.c.l.b16 %v82
    %v114 = vunpack.c.h.b16 %v82
    %v115 = vunpack.c.l.b16 %v83
    %v116 = vunpack.c.h.b16 %v83
    %v117 = vunpack.c.l.b16 %v84
    %v118 = vunpack.c.h.b16 %v84
    %v119 = vpack.c.b16 %v115, %v111
    %v120 = vpack.c.b16 %v116, %v112
    %v121 = vpack.c.b16 %v117, %v113
    %v122 = vpack.c.b16 %v118, %v114
    %vm127 = vcmask 130048
    %v129 = vsel %vm127, %v80, 0
    %131 = vmatprep.subr.bf16.mxu0 %v120
    %132 = vmatpush1.bf16.msra.mxu0 %v119
    %133 = vmatprep.subr.bf16.mxu0 0
    %134 = vmatpush1.bf16.msra.mxu0 0
    %135 = vmatprep.subr.bf16.mxu0 0
    %136 = vmatpush1.bf16.msra.mxu0 0
    %137 = vmatprep.subr.bf16.mxu0 0
    %138 = vmatpush1.bf16.msra.mxu0 0
    %139 = vmatprep.subr.bf16.mxu0 0
    %140 = vmatpush1.bf16.msra.mxu0 0
    %141 = vmatprep.subr.bf16.mxu0 0
    %142 = vmatpush1.bf16.msra.mxu0 0
    %143 = vmatprep.subr.bf16.mxu0 0
    %144 = vmatpush1.bf16.msra.mxu0 0
    %145 = vmatprep.subr.bf16.mxu0 0
    %146 = vmatpush1.bf16.msra.mxu0 0
    %147 = vmatprep.subr.bf16.mxu0 0
    %148 = vmatpush1.bf16.msra.mxu0 0
    %149 = vmatprep.subr.bf16.mxu0 0
    %150 = vmatpush1.bf16.msra.mxu0 0
    %151 = vmatprep.subr.bf16.mxu0 0
    %152 = vmatpush1.bf16.msra.mxu0 0
    %153 = vmatprep.subr.bf16.mxu0 0
    %154 = vmatpush1.bf16.msra.mxu0 0
    %155 = vmatprep.subr.bf16.mxu0 0
    %156 = vmatpush1.bf16.msra.mxu0 0
    %157 = vmatprep.subr.bf16.mxu0 0
    %158 = vmatpush1.bf16.msra.mxu0 0
    %159 = vmatprep.subr.bf16.mxu0 0
    %160 = vmatpush1.bf16.msra.mxu0 0
    %161 = vmatprep.subr.bf16.mxu0 0
    %162 = vmatpush1.bf16.msra.mxu0 0
    %163 = vmatprep.mubr.bf16.mxu0 0
    %164 = vmatmul.mubr.bf16.gmra.mrb[0].mxu0 %v129
    %v165 = vpop.f32.mrb[0].mxu0
    %v166 = vadd.f32 %v90, %v165
    %v167 = vpop.f32.mrb[0].mxu0
    %v168 = vadd.f32 %v94, %v167
    %v169 = vpop.f32.mrb[0].mxu0
    %v170 = vadd.f32 %v90, %v169
    %v171 = vpop.f32.mrb[0].mxu0
    %v172 = vadd.f32 %v94, %v171
    %173 = vdwg.mxu0
    %174 = vmatprep.subr.bf16.mxu0 %v122
    %175 = vmatpush1.bf16.msra.mxu0 %v121
    %176 = vmatprep.subr.bf16.mxu0 0
    %177 = vmatpush1.bf16.msra.mxu0 0
    %178 = vmatprep.subr.bf16.mxu0 0
    %179 = vmatpush1.bf16.msra.mxu0 0
    %180 = vmatprep.subr.bf16.mxu0 0
    %181 = vmatpush1.bf16.msra.mxu0 0
    %182 = vmatprep.subr.bf16.mxu0 0
    %183 = vmatpush1.bf16.msra.mxu0 0
    %184 = vmatprep.subr.bf16.mxu0 0
    %185 = vmatpush1.bf16.msra.mxu0 0
    %186 = vmatprep.subr.bf16.mxu0 0
    %187 = vmatpush1.bf16.msra.mxu0 0
    %188 = vmatprep.subr.bf16.mxu0 0
    %189 = vmatpush1.bf16.msra.mxu0 0
    %190 = vmatprep.subr.bf16.mxu0 0
    %191 = vmatpush1.bf16.msra.mxu0 0
    %192 = vmatprep.subr.bf16.mxu0 0
    %193 = vmatpush1.bf16.msra.mxu0 0
    %194 = vmatprep.subr.bf16.mxu0 0
    %195 = vmatpush1.bf16.msra.mxu0 0
    %196 = vmatprep.subr.bf16.mxu0 0
    %197 = vmatpush1.bf16.msra.mxu0 0
    %198 = vmatprep.subr.bf16.mxu0 0
    %199 = vmatpush1.bf16.msra.mxu0 0
    %200 = vmatprep.subr.bf16.mxu0 0
    %201 = vmatpush1.bf16.msra.mxu0 0
    %202 = vmatprep.subr.bf16.mxu0 0
    %203 = vmatpush1.bf16.msra.mxu0 0
    %204 = vmatprep.subr.bf16.mxu0 0
    %205 = vmatpush1.bf16.msra.mxu0 0
    %206 = vmatprep.mubr.bf16.mxu0 0
    %207 = vmatmul.mubr.bf16.gmra.mrb[0].mxu0 %v129
    %v208 = vpop.f32.mrb[0].mxu0
    %v209 = vadd.f32 %v98, %v208
    %v210 = vpop.f32.mrb[0].mxu0
    %v211 = vadd.f32 %v102, %v210
    %v212 = vpop.f32.mrb[0].mxu0
    %v213 = vadd.f32 %v98, %v212
    %v214 = vpop.f32.mrb[0].mxu0
    %v215 = vadd.f32 %v102, %v214
    %216 = vdwg.mxu0
    %v217 = vmax.f32 %v166, 0.0
    %v218 = vmax.f32 %v168, 0.0
    %v219 = vmax.f32 %v209, 0.0
    %v220 = vmax.f32 %v211, 0.0
    %v221 = vmax.f32 %v170, 0.0
    %v222 = vmax.f32 %v172, 0.0
    %v223 = vmax.f32 %v213, 0.0
    %v224 = vmax.f32 %v215, 0.0
    %v225 = vpack.c.bf16 %v221, %v217
    %v226 = vpack.c.bf16 %v222, %v218
    %v227 = vpack.c.bf16 %v223, %v219
    %v228 = vpack.c.bf16 %v224, %v220
    %v229 = vld [vmem:[#allocation4] sm:$0xff]
    %v230 = vld [vmem:[#allocation4 + $0x8] sm:$0xf]
    %v231 = vld [vmem:[#allocation4 + $0xc] sm:$0xff]
    %v232 = vld [vmem:[#allocation4 + $0x14] sm:$0xf]
    %v233 = vld [vmem:[#allocation4 + $0x18] sm:$0xff]
    %v234 = vld [vmem:[#allocation4 + $0x20] sm:$0xf]
    %v235 = vld [vmem:[#allocation4 + $0x24] sm:$0xff]
    %v236 = vld [vmem:[#allocation4 + $0x2c] sm:$0xf]
    %v237 = vld [vmem:[#allocation4 + $0x30] sm:$0xff]
    %v238 = vld [vmem:[#allocation4 + $0x38] sm:$0xf]
    %v239 = vld [vmem:[#allocation4 + $0x3c] sm:$0xff]
    %v240 = vld [vmem:[#allocation4 + $0x44] sm:$0xf]
    %v241 = vld [vmem:[#allocation4 + $0x48] sm:$0xff]
    %v242 = vld [vmem:[#allocation4 + $0x50] sm:$0xf]
    %v243 = vld [vmem:[#allocation4 + $0x54] sm:$0xff]
    %v244 = vld [vmem:[#allocation4 + $0x5c] sm:$0xf]
    %v245 = vld [vmem:[#allocation4 + $0x60] sm:$0xff]
    %v246 = vld [vmem:[#allocation4 + $0x68] sm:$0xf]
    %v247 = vld [vmem:[#allocation4 + $0x6c] sm:$0xff]
    %v248 = vld [vmem:[#allocation4 + $0x74] sm:$0xf]
    %v249 = vld [vmem:[#allocation4 + $0x78] sm:$0xff]
    %v250 = vld [vmem:[#allocation4 + $0x80] sm:$0xf]
    %v251 = vld [vmem:[#allocation4 + $0x84] sm:$0xff]
    %v252 = vld [vmem:[#allocation4 + $0x8c] sm:$0xf]
    %v253 = vld [vmem:[#allocation4 + $0x90] sm:$0xff]
    %v254 = vld [vmem:[#allocation4 + $0x98] sm:$0xf]
    %v255 = vld [vmem:[#allocation4 + $0x9c] sm:$0xff]
    %v256 = vld [vmem:[#allocation4 + $0xa4] sm:$0xf]
    %v257 = vld [vmem:[#allocation4 + $0xa8] sm:$0xff]
    %v258 = vld [vmem:[#allocation4 + $0xb0] sm:$0xf]
    %v259 = vld [vmem:[#allocation4 + $0xb4] sm:$0xff]
    %v260 = vld [vmem:[#allocation4 + $0xbc] sm:$0xf]
    %v261 = vld [vmem:[#allocation4 + $0xc0] sm:$0xff]
    %v262 = vld [vmem:[#allocation4 + $0xc8] sm:$0xf]
    %v263 = vld [vmem:[#allocation4 + $0xcc] sm:$0xff]
    %v264 = vld [vmem:[#allocation4 + $0xd4] sm:$0xf]
    %v265 = vld [vmem:[#allocation4 + $0xd8] sm:$0xff]
    %v266 = vld [vmem:[#allocation4 + $0xe0] sm:$0xf]
    %v267 = vld [vmem:[#allocation4 + $0xe4] sm:$0xff]
    %v268 = vld [vmem:[#allocation4 + $0xec] sm:$0xf]
    %v269 = vld [vmem:[#allocation4 + $0xf0] sm:$0xff]
    %v270 = vld [vmem:[#allocation4 + $0xf8] sm:$0xf]
    %v271 = vld [vmem:[#allocation4 + $0xfc] sm:$0xff]
    %v272 = vld [vmem:[#allocation4 + $0x104] sm:$0xf]
    %v273 = vld [vmem:[#allocation4 + $0x108] sm:$0xff]
    %v274 = vld [vmem:[#allocation4 + $0x110] sm:$0xf]
    %v275 = vld [vmem:[#allocation4 + $0x114] sm:$0xff]
    %v276 = vld [vmem:[#allocation4 + $0x11c] sm:$0xf]
    %v277 = vld [vmem:[#allocation4 + $0x120] sm:$0xff]
    %v278 = vld [vmem:[#allocation4 + $0x128] sm:$0xf]
    %v279 = vld [vmem:[#allocation4 + $0x12c] sm:$0xff]
    %v280 = vld [vmem:[#allocation4 + $0x134] sm:$0xf]
    %v281 = vld [vmem:[#allocation4 + $0x138] sm:$0xff]
    %v282 = vld [vmem:[#allocation4 + $0x140] sm:$0xf]
    %v283 = vld [vmem:[#allocation4 + $0x144] sm:$0xff]
    %v284 = vld [vmem:[#allocation4 + $0x14c] sm:$0xf]
    %v285 = vld [vmem:[#allocation4 + $0x150] sm:$0xff]
    %v286 = vld [vmem:[#allocation4 + $0x158] sm:$0xf]
    %v287 = vld [vmem:[#allocation4 + $0x15c] sm:$0xff]
    %v288 = vld [vmem:[#allocation4 + $0x164] sm:$0xf]
    %v289 = vld [vmem:[#allocation4 + $0x168] sm:$0xff]
    %v290 = vld [vmem:[#allocation4 + $0x170] sm:$0xf]
    %v291 = vld [vmem:[#allocation4 + $0x174] sm:$0xff]
    %v292 = vld [vmem:[#allocation4 + $0x17c] sm:$0xf]
    %v293 = vld [vmem:[#allocation4 + $0x180] sm:$0xff]
    %v294 = vld [vmem:[#allocation4 + $0x188] sm:$0xf]
    %v295 = vld [vmem:[#allocation4 + $0x18c] sm:$0xff]
    %v296 = vld [vmem:[#allocation4 + $0x194] sm:$0xf]
    %v297 = vld [vmem:[#allocation4 + $0x198] sm:$0xff]
    %v298 = vld [vmem:[#allocation4 + $0x1a0] sm:$0xf]
    %v299 = vld [vmem:[#allocation4 + $0x1a4] sm:$0xff]
    %v300 = vld [vmem:[#allocation4 + $0x1ac] sm:$0xf]
    %v301 = vld [vmem:[#allocation4 + $0x1b0] sm:$0xff]
    %v302 = vld [vmem:[#allocation4 + $0x1b8] sm:$0xf]
    %v303 = vld [vmem:[#allocation4 + $0x1bc] sm:$0xff]
    %v304 = vld [vmem:[#allocation4 + $0x1c4] sm:$0xf]
    %v305 = vld [vmem:[#allocation4 + $0x1c8] sm:$0xff]
    %v306 = vld [vmem:[#allocation4 + $0x1d0] sm:$0xf]
    %v307 = vld [vmem:[#allocation4 + $0x1d4] sm:$0xff]
    %v308 = vld [vmem:[#allocation4 + $0x1dc] sm:$0xf]
    %v309 = vld [vmem:[#allocation4 + $0x1e0] sm:$0xff]
    %v310 = vld [vmem:[#allocation4 + $0x1e8] sm:$0xf]
    %v311 = vld [vmem:[#allocation4 + $0x1ec] sm:$0xff]
    %v312 = vld [vmem:[#allocation4 + $0x1f4] sm:$0xf]
    %v313 = vld [vmem:[#allocation4 + $0x1f8] sm:$0xff]
    %v314 = vld [vmem:[#allocation4 + $0x200] sm:$0xf]
    %v315 = vld [vmem:[#allocation4 + $0x204] sm:$0xff]
    %v316 = vld [vmem:[#allocation4 + $0x20c] sm:$0xf]
    %v317 = vld [vmem:[#allocation4 + $0x210] sm:$0xff]
    %v318 = vld [vmem:[#allocation4 + $0x218] sm:$0xf]
    %v319 = vld [vmem:[#allocation4 + $0x21c] sm:$0xff]
    %v320 = vld [vmem:[#allocation4 + $0x224] sm:$0xf]
    %v321 = vld [vmem:[#allocation4 + $0x228] sm:$0xff]
    %v322 = vld [vmem:[#allocation4 + $0x230] sm:$0xf]
    %v323 = vld [vmem:[#allocation4 + $0x234] sm:$0xff]
    %v324 = vld [vmem:[#allocation4 + $0x23c] sm:$0xf]
    %v325 = vld [vmem:[#allocation4 + $0x240] sm:$0xff]
    %v326 = vld [vmem:[#allocation4 + $0x248] sm:$0xf]
    %v327 = vld [vmem:[#allocation4 + $0x24c] sm:$0xff]
    %v328 = vld [vmem:[#allocation4 + $0x254] sm:$0xf]
    %v329 = vld [vmem:[#allocation4 + $0x258] sm:$0xff]
    %v330 = vld [vmem:[#allocation4 + $0x260] sm:$0xf]
    %v331 = vld [vmem:[#allocation4 + $0x264] sm:$0xff]
    %v332 = vld [vmem:[#allocation4 + $0x26c] sm:$0xf]
    %v333 = vld [vmem:[#allocation4 + $0x270] sm:$0xff]
    %v334 = vld [vmem:[#allocation4 + $0x278] sm:$0xf]
    %v335 = vld [vmem:[#allocation4 + $0x27c] sm:$0xff]
    %v336 = vld [vmem:[#allocation4 + $0x284] sm:$0xf]
    %v337 = vld [vmem:[#allocation4 + $0x288] sm:$0xff]
    %v338 = vld [vmem:[#allocation4 + $0x290] sm:$0xf]
    %v339 = vld [vmem:[#allocation4 + $0x294] sm:$0xff]
    %v340 = vld [vmem:[#allocation4 + $0x29c] sm:$0xf]
    %v341 = vld [vmem:[#allocation4 + $0x2a0] sm:$0xff]
    %v342 = vld [vmem:[#allocation4 + $0x2a8] sm:$0xf]
    %v343 = vld [vmem:[#allocation4 + $0x2ac] sm:$0xff]
    %v344 = vld [vmem:[#allocation4 + $0x2b4] sm:$0xf]
    %v345 = vld [vmem:[#allocation4 + $0x2b8] sm:$0xff]
    %v346 = vld [vmem:[#allocation4 + $0x2c0] sm:$0xf]
    %v347 = vld [vmem:[#allocation4 + $0x2c4] sm:$0xff]
    %v348 = vld [vmem:[#allocation4 + $0x2cc] sm:$0xf]
    %v349 = vld [vmem:[#allocation4 + $0x2d0] sm:$0xff]
    %v350 = vld [vmem:[#allocation4 + $0x2d8] sm:$0xf]
    %v351 = vld [vmem:[#allocation4 + $0x2dc] sm:$0xff]
    %v352 = vld [vmem:[#allocation4 + $0x2e4] sm:$0xf]
    %v353 = vld [vmem:[#allocation4 + $0x2e8] sm:$0xff]
    %v354 = vld [vmem:[#allocation4 + $0x2f0] sm:$0xf]
    %v355 = vld [vmem:[#allocation4 + $0x2f4] sm:$0xff]
    %v356 = vld [vmem:[#allocation4 + $0x2fc] sm:$0xf]
    %v357 = vld [vmem:[#allocation6] sm:$0x7]
    %v359 = vlaneseq
    %v360 = vshrl.u32 %v359, 7
    %v361 = vsub.s32 0, %v360
    %v362 = vrot.slane %v357, %v361
    %v363 = vlaneseq
    %v364 = vshrl.u32 %v363, 7
    %v365 = vsub.s32 1, %v364
    %v366 = vrot.slane %v357, %v365
    %v367 = vlaneseq
    %v368 = vshrl.u32 %v367, 7
    %v369 = vsub.s32 2, %v368
    %v370 = vrot.slane %v357, %v369
    %v502 = vunpack.c.l.b16 %v229
    %v503 = vunpack.c.h.b16 %v229
    %v504 = vunpack.c.l.b16 %v230
    %v505 = vunpack.c.l.b16 %v231
    %v506 = vunpack.c.h.b16 %v231
    %v507 = vunpack.c.l.b16 %v232
    %v508 = vunpack.c.l.b16 %v233
    %v509 = vunpack.c.h.b16 %v233
    %v510 = vunpack.c.l.b16 %v234
    %v511 = vunpack.c.l.b16 %v235
    %v512 = vunpack.c.h.b16 %v235
    %v513 = vunpack.c.l.b16 %v236
    %v514 = vunpack.c.l.b16 %v237
    %v515 = vunpack.c.h.b16 %v237
    %v516 = vunpack.c.l.b16 %v238
    %v517 = vunpack.c.l.b16 %v239
    %v518 = vunpack.c.h.b16 %v239
    %v519 = vunpack.c.l.b16 %v240
    %v520 = vunpack.c.l.b16 %v241
    %v521 = vunpack.c.h.b16 %v241
    %v522 = vunpack.c.l.b16 %v242
    %v523 = vunpack.c.l.b16 %v243
    %v524 = vunpack.c.h.b16 %v243
    %v525 = vunpack.c.l.b16 %v244
    %v526 = vunpack.c.l.b16 %v245
    %v527 = vunpack.c.h.b16 %v245
    %v528 = vunpack.c.l.b16 %v246
    %v529 = vunpack.c.l.b16 %v247
    %v530 = vunpack.c.h.b16 %v247
    %v531 = vunpack.c.l.b16 %v248
    %v532 = vunpack.c.l.b16 %v249
    %v533 = vunpack.c.h.b16 %v249
    %v534 = vunpack.c.l.b16 %v250
    %v535 = vunpack.c.l.b16 %v251
    %v536 = vunpack.c.h.b16 %v251
    %v537 = vunpack.c.l.b16 %v252
    %v538 = vunpack.c.l.b16 %v253
    %v539 = vunpack.c.h.b16 %v253
    %v540 = vunpack.c.l.b16 %v254
    %v541 = vunpack.c.l.b16 %v255
    %v542 = vunpack.c.h.b16 %v255
    %v543 = vunpack.c.l.b16 %v256
    %v544 = vunpack.c.l.b16 %v257
    %v545 = vunpack.c.h.b16 %v257
    %v546 = vunpack.c.l.b16 %v258
    %v547 = vunpack.c.l.b16 %v259
    %v548 = vunpack.c.h.b16 %v259
    %v549 = vunpack.c.l.b16 %v260
    %v550 = vunpack.c.l.b16 %v261
    %v551 = vunpack.c.h.b16 %v261
    %v552 = vunpack.c.l.b16 %v262
    %v553 = vunpack.c.l.b16 %v263
    %v554 = vunpack.c.h.b16 %v263
    %v555 = vunpack.c.l.b16 %v264
    %v556 = vunpack.c.l.b16 %v265
    %v557 = vunpack.c.h.b16 %v265
    %v558 = vunpack.c.l.b16 %v266
    %v559 = vunpack.c.l.b16 %v267
    %v560 = vunpack.c.h.b16 %v267
    %v561 = vunpack.c.l.b16 %v268
    %v562 = vunpack.c.l.b16 %v269
    %v563 = vunpack.c.h.b16 %v269
    %v564 = vunpack.c.l.b16 %v270
    %v565 = vunpack.c.l.b16 %v271
    %v566 = vunpack.c.h.b16 %v271
    %v567 = vunpack.c.l.b16 %v272
    %v568 = vunpack.c.l.b16 %v273
    %v569 = vunpack.c.h.b16 %v273
    %v570 = vunpack.c.l.b16 %v274
    %v571 = vunpack.c.l.b16 %v275
    %v572 = vunpack.c.h.b16 %v275
    %v573 = vunpack.c.l.b16 %v276
    %v574 = vunpack.c.l.b16 %v277
    %v575 = vunpack.c.h.b16 %v277
    %v576 = vunpack.c.l.b16 %v278
    %v577 = vunpack.c.l.b16 %v279
    %v578 = vunpack.c.h.b16 %v279
    %v579 = vunpack.c.l.b16 %v280
    %v580 = vunpack.c.l.b16 %v281
    %v581 = vunpack.c.h.b16 %v281
    %v582 = vunpack.c.l.b16 %v282
    %v583 = vunpack.c.l.b16 %v283
    %v584 = vunpack.c.h.b16 %v283
    %v585 = vunpack.c.l.b16 %v284
    %v586 = vunpack.c.l.b16 %v285
    %v587 = vunpack.c.h.b16 %v285
    %v588 = vunpack.c.l.b16 %v286
    %v589 = vunpack.c.l.b16 %v287
    %v590 = vunpack.c.h.b16 %v287
    %v591 = vunpack.c.l.b16 %v288
    %v592 = vunpack.c.l.b16 %v289
    %v593 = vunpack.c.h.b16 %v289
    %v594 = vunpack.c.l.b16 %v290
    %v595 = vunpack.c.l.b16 %v291
    %v596 = vunpack.c.h.b16 %v291
    %v597 = vunpack.c.l.b16 %v292
    %v598 = vunpack.c.l.b16 %v293
    %v599 = vunpack.c.h.b16 %v293
    %v600 = vunpack.c.l.b16 %v294
    %v601 = vunpack.c.l.b16 %v295
    %v602 = vunpack.c.h.b16 %v295
    %v603 = vunpack.c.l.b16 %v296
    %v604 = vunpack.c.l.b16 %v297
    %v605 = vunpack.c.h.b16 %v297
    %v606 = vunpack.c.l.b16 %v298
    %v607 = vunpack.c.l.b16 %v299
    %v608 = vunpack.c.h.b16 %v299
    %v609 = vunpack.c.l.b16 %v300
    %v610 = vunpack.c.l.b16 %v301
    %v611 = vunpack.c.h.b16 %v301
    %v612 = vunpack.c.l.b16 %v302
    %v613 = vunpack.c.l.b16 %v303
    %v614 = vunpack.c.h.b16 %v303
    %v615 = vunpack.c.l.b16 %v304
    %v616 = vunpack.c.l.b16 %v305
    %v617 = vunpack.c.h.b16 %v305
    %v618 = vunpack.c.l.b16 %v306
    %v619 = vunpack.c.l.b16 %v307
    %v620 = vunpack.c.h.b16 %v307
    %v621 = vunpack.c.l.b16 %v308
    %v622 = vunpack.c.l.b16 %v309
    %v623 = vunpack.c.h.b16 %v309
    %v624 = vunpack.c.l.b16 %v310
    %v625 = vunpack.c.l.b16 %v311
    %v626 = vunpack.c.h.b16 %v311
    %v627 = vunpack.c.l.b16 %v312
    %v628 = vunpack.c.l.b16 %v313
    %v629 = vunpack.c.h.b16 %v313
    %v630 = vunpack.c.l.b16 %v314
    %v631 = vunpack.c.l.b16 %v315
    %v632 = vunpack.c.h.b16 %v315
    %v633 = vunpack.c.l.b16 %v316
    %v634 = vunpack.c.l.b16 %v317
    %v635 = vunpack.c.h.b16 %v317
    %v636 = vunpack.c.l.b16 %v318
    %v637 = vunpack.c.l.b16 %v319
    %v638 = vunpack.c.h.b16 %v319
    %v639 = vunpack.c.l.b16 %v320
    %v640 = vunpack.c.l.b16 %v321
    %v641 = vunpack.c.h.b16 %v321
    %v642 = vunpack.c.l.b16 %v322
    %v643 = vunpack.c.l.b16 %v323
    %v644 = vunpack.c.h.b16 %v323
    %v645 = vunpack.c.l.b16 %v324
    %v646 = vunpack.c.l.b16 %v325
    %v647 = vunpack.c.h.b16 %v325
    %v648 = vunpack.c.l.b16 %v326
    %v649 = vunpack.c.l.b16 %v327
    %v650 = vunpack.c.h.b16 %v327
    %v651 = vunpack.c.l.b16 %v328
    %v652 = vunpack.c.l.b16 %v329
    %v653 = vunpack.c.h.b16 %v329
    %v654 = vunpack.c.l.b16 %v330
    %v655 = vunpack.c.l.b16 %v331
    %v656 = vunpack.c.h.b16 %v331
    %v657 = vunpack.c.l.b16 %v332
    %v658 = vunpack.c.l.b16 %v333
    %v659 = vunpack.c.h.b16 %v333
    %v660 = vunpack.c.l.b16 %v334
    %v661 = vunpack.c.l.b16 %v335
    %v662 = vunpack.c.h.b16 %v335
    %v663 = vunpack.c.l.b16 %v336
    %v664 = vunpack.c.l.b16 %v337
    %v665 = vunpack.c.h.b16 %v337
    %v666 = vunpack.c.l.b16 %v338
    %v667 = vunpack.c.l.b16 %v339
    %v668 = vunpack.c.h.b16 %v339
    %v669 = vunpack.c.l.b16 %v340
    %v670 = vunpack.c.l.b16 %v341
    %v671 = vunpack.c.h.b16 %v341
    %v672 = vunpack.c.l.b16 %v342
    %v673 = vunpack.c.l.b16 %v343
    %v674 = vunpack.c.h.b16 %v343
    %v675 = vunpack.c.l.b16 %v344
    %v676 = vunpack.c.l.b16 %v345
    %v677 = vunpack.c.h.b16 %v345
    %v678 = vunpack.c.l.b16 %v346
    %v679 = vunpack.c.l.b16 %v347
    %v680 = vunpack.c.h.b16 %v347
    %v681 = vunpack.c.l.b16 %v348
    %v682 = vunpack.c.l.b16 %v349
    %v683 = vunpack.c.h.b16 %v349
    %v684 = vunpack.c.l.b16 %v350
    %v685 = vunpack.c.l.b16 %v351
    %v686 = vunpack.c.h.b16 %v351
    %v687 = vunpack.c.l.b16 %v352
    %v688 = vunpack.c.l.b16 %v353
    %v689 = vunpack.c.h.b16 %v353
    %v690 = vunpack.c.l.b16 %v354
    %v691 = vunpack.c.l.b16 %v355
    %v692 = vunpack.c.h.b16 %v355
    %v693 = vunpack.c.l.b16 %v356
    %v694 = vpack.c.b16 %v505, %v502
    %v695 = vpack.c.b16 %v506, %v503
    %v696 = vpack.c.b16 %v507, %v504
    %v697 = vpack.c.b16 %v511, %v508
    %v698 = vpack.c.b16 %v512, %v509
    %v699 = vpack.c.b16 %v513, %v510
    %v700 = vpack.c.b16 %v517, %v514
    %v701 = vpack.c.b16 %v518, %v515
    %v702 = vpack.c.b16 %v519, %v516
    %v703 = vpack.c.b16 %v523, %v520
    %v704 = vpack.c.b16 %v524, %v521
    %v705 = vpack.c.b16 %v525, %v522
    %v706 = vpack.c.b16 %v529, %v526
    %v707 = vpack.c.b16 %v530, %v527
    %v708 = vpack.c.b16 %v531, %v528
    %v709 = vpack.c.b16 %v535, %v532
    %v710 = vpack.c.b16 %v536, %v533
    %v711 = vpack.c.b16 %v537, %v534
    %v712 = vpack.c.b16 %v541, %v538
    %v713 = vpack.c.b16 %v542, %v539
    %v714 = vpack.c.b16 %v543, %v540
    %v715 = vpack.c.b16 %v547, %v544
    %v716 = vpack.c.b16 %v548, %v545
    %v717 = vpack.c.b16 %v549, %v546
    %v718 = vpack.c.b16 %v553, %v550
    %v719 = vpack.c.b16 %v554, %v551
    %v720 = vpack.c.b16 %v555, %v552
    %v721 = vpack.c.b16 %v559, %v556
    %v722 = vpack.c.b16 %v560, %v557
    %v723 = vpack.c.b16 %v561, %v558
    %v724 = vpack.c.b16 %v565, %v562
    %v725 = vpack.c.b16 %v566, %v563
    %v726 = vpack.c.b16 %v567, %v564
    %v727 = vpack.c.b16 %v571, %v568
    %v728 = vpack.c.b16 %v572, %v569
    %v729 = vpack.c.b16 %v573, %v570
    %v730 = vpack.c.b16 %v577, %v574
    %v731 = vpack.c.b16 %v578, %v575
    %v732 = vpack.c.b16 %v579, %v576
    %v733 = vpack.c.b16 %v583, %v580
    %v734 = vpack.c.b16 %v584, %v581
    %v735 = vpack.c.b16 %v585, %v582
    %v736 = vpack.c.b16 %v589, %v586
    %v737 = vpack.c.b16 %v590, %v587
    %v738 = vpack.c.b16 %v591, %v588
    %v739 = vpack.c.b16 %v595, %v592
    %v740 = vpack.c.b16 %v596, %v593
    %v741 = vpack.c.b16 %v597, %v594
    %v742 = vpack.c.b16 %v601, %v598
    %v743 = vpack.c.b16 %v602, %v599
    %v744 = vpack.c.b16 %v603, %v600
    %v745 = vpack.c.b16 %v607, %v604
    %v746 = vpack.c.b16 %v608, %v605
    %v747 = vpack.c.b16 %v609, %v606
    %v748 = vpack.c.b16 %v613, %v610
    %v749 = vpack.c.b16 %v614, %v611
    %v750 = vpack.c.b16 %v615, %v612
    %v751 = vpack.c.b16 %v619, %v616
    %v752 = vpack.c.b16 %v620, %v617
    %v753 = vpack.c.b16 %v621, %v618
    %v754 = vpack.c.b16 %v625, %v622
    %v755 = vpack.c.b16 %v626, %v623
    %v756 = vpack.c.b16 %v627, %v624
    %v757 = vpack.c.b16 %v631, %v628
    %v758 = vpack.c.b16 %v632, %v629
    %v759 = vpack.c.b16 %v633, %v630
    %v760 = vpack.c.b16 %v637, %v634
    %v761 = vpack.c.b16 %v638, %v635
    %v762 = vpack.c.b16 %v639, %v636
    %v763 = vpack.c.b16 %v643, %v640
    %v764 = vpack.c.b16 %v644, %v641
    %v765 = vpack.c.b16 %v645, %v642
    %v766 = vpack.c.b16 %v649, %v646
    %v767 = vpack.c.b16 %v650, %v647
    %v768 = vpack.c.b16 %v651, %v648
    %v769 = vpack.c.b16 %v655, %v652
    %v770 = vpack.c.b16 %v656, %v653
    %v771 = vpack.c.b16 %v657, %v654
    %v772 = vpack.c.b16 %v661, %v658
    %v773 = vpack.c.b16 %v662, %v659
    %v774 = vpack.c.b16 %v663, %v660
    %v775 = vpack.c.b16 %v667, %v664
    %v776 = vpack.c.b16 %v668, %v665
    %v777 = vpack.c.b16 %v669, %v666
    %v778 = vpack.c.b16 %v673, %v670
    %v779 = vpack.c.b16 %v674, %v671
    %v780 = vpack.c.b16 %v675, %v672
    %v781 = vpack.c.b16 %v679, %v676
    %v782 = vpack.c.b16 %v680, %v677
    %v783 = vpack.c.b16 %v681, %v678
    %v784 = vpack.c.b16 %v685, %v682
    %v785 = vpack.c.b16 %v686, %v683
    %v786 = vpack.c.b16 %v687, %v684
    %v787 = vpack.c.b16 %v691, %v688
    %v788 = vpack.c.b16 %v692, %v689
    %v789 = vpack.c.b16 %v693, %v690
    %886 = vmatprep.subr.bf16.mxu0 %v695
    %887 = vmatpush1.bf16.msra.mxu0 %v694
    %888 = vmatprep.subr.bf16.mxu0 %v698
    %889 = vmatpush1.bf16.msra.mxu0 %v697
    %890 = vmatprep.subr.bf16.mxu0 %v701
    %891 = vmatpush1.bf16.msra.mxu0 %v700
    %892 = vmatprep.subr.bf16.mxu0 %v704
    %893 = vmatpush1.bf16.msra.mxu0 %v703
    %894 = vmatprep.subr.bf16.mxu0 %v707
    %895 = vmatpush1.bf16.msra.mxu0 %v706
    %896 = vmatprep.subr.bf16.mxu0 %v710
    %897 = vmatpush1.bf16.msra.mxu0 %v709
    %898 = vmatprep.subr.bf16.mxu0 %v713
    %899 = vmatpush1.bf16.msra.mxu0 %v712
    %900 = vmatprep.subr.bf16.mxu0 %v716
    %901 = vmatpush1.bf16.msra.mxu0 %v715
    %902 = vmatprep.subr.bf16.mxu0 %v719
    %903 = vmatpush1.bf16.msra.mxu0 %v718
    %904 = vmatprep.subr.bf16.mxu0 %v722
    %905 = vmatpush1.bf16.msra.mxu0 %v721
    %906 = vmatprep.subr.bf16.mxu0 %v725
    %907 = vmatpush1.bf16.msra.mxu0 %v724
    %908 = vmatprep.subr.bf16.mxu0 %v728
    %909 = vmatpush1.bf16.msra.mxu0 %v727
    %910 = vmatprep.subr.bf16.mxu0 %v731
    %911 = vmatpush1.bf16.msra.mxu0 %v730
    %912 = vmatprep.subr.bf16.mxu0 %v734
    %913 = vmatpush1.bf16.msra.mxu0 %v733
    %914 = vmatprep.subr.bf16.mxu0 %v737
    %915 = vmatpush1.bf16.msra.mxu0 %v736
    %916 = vmatprep.subr.bf16.mxu0 %v740
    %917 = vmatpush1.bf16.msra.mxu0 %v739
    %918 = vmatprep.mubr.bf16.mxu0 %v226
    %919 = vmatmul.mubr.bf16.gmra.mrb[0].mxu0 %v225
    %v920 = vpop.f32.mrb[0].mxu0
    %v921 = vadd.f32 %v362, %v920
    %v922 = vpop.f32.mrb[0].mxu0
    %v923 = vadd.f32 %v366, %v922
    %v924 = vpop.f32.mrb[0].mxu0
    %v925 = vadd.f32 %v362, %v924
    %v926 = vpop.f32.mrb[0].mxu0
    %v927 = vadd.f32 %v366, %v926
    %928 = vdwg.mxu0
    %929 = vmatprep.subr.bf16.mxu0 %v743
    %930 = vmatpush1.bf16.msra.mxu0 %v742
    %931 = vmatprep.subr.bf16.mxu0 %v746
    %932 = vmatpush1.bf16.msra.mxu0 %v745
    %933 = vmatprep.subr.bf16.mxu0 %v749
    %934 = vmatpush1.bf16.msra.mxu0 %v748
    %935 = vmatprep.subr.bf16.mxu0 %v752
    %936 = vmatpush1.bf16.msra.mxu0 %v751
    %937 = vmatprep.subr.bf16.mxu0 %v755
    %938 = vmatpush1.bf16.msra.mxu0 %v754
    %939 = vmatprep.subr.bf16.mxu0 %v758
    %940 = vmatpush1.bf16.msra.mxu0 %v757
    %941 = vmatprep.subr.bf16.mxu0 %v761
    %942 = vmatpush1.bf16.msra.mxu0 %v760
    %943 = vmatprep.subr.bf16.mxu0 %v764
    %944 = vmatpush1.bf16.msra.mxu0 %v763
    %945 = vmatprep.subr.bf16.mxu0 %v767
    %946 = vmatpush1.bf16.msra.mxu0 %v766
    %947 = vmatprep.subr.bf16.mxu0 %v770
    %948 = vmatpush1.bf16.msra.mxu0 %v769
    %949 = vmatprep.subr.bf16.mxu0 %v773
    %950 = vmatpush1.bf16.msra.mxu0 %v772
    %951 = vmatprep.subr.bf16.mxu0 %v776
    %952 = vmatpush1.bf16.msra.mxu0 %v775
    %953 = vmatprep.subr.bf16.mxu0 %v779
    %954 = vmatpush1.bf16.msra.mxu0 %v778
    %955 = vmatprep.subr.bf16.mxu0 %v782
    %956 = vmatpush1.bf16.msra.mxu0 %v781
    %957 = vmatprep.subr.bf16.mxu0 %v785
    %958 = vmatpush1.bf16.msra.mxu0 %v784
    %959 = vmatprep.subr.bf16.mxu0 %v788
    %960 = vmatpush1.bf16.msra.mxu0 %v787
    %961 = vmatprep.mubr.bf16.mxu0 %v228
    %962 = vmatmul.mubr.bf16.gmra.mrb[0].mxu0 %v227
    %v963 = vpop.f32.mrb[0].mxu0
    %v964 = vadd.f32 %v921, %v963
    %v965 = vpop.f32.mrb[0].mxu0
    %v966 = vadd.f32 %v923, %v965
    %v967 = vpop.f32.mrb[0].mxu0
    %v968 = vadd.f32 %v925, %v967
    %v969 = vpop.f32.mrb[0].mxu0
    %v970 = vadd.f32 %v927, %v969
    %971 = vdwg.mxu0
    %972 = vmatprep.subr.bf16.mxu0 0
    %973 = vmatpush1.bf16.msra.mxu0 %v696
    %974 = vmatprep.subr.bf16.mxu0 0
    %975 = vmatpush1.bf16.msra.mxu0 %v699
    %976 = vmatprep.subr.bf16.mxu0 0
    %977 = vmatpush1.bf16.msra.mxu0 %v702
    %978 = vmatprep.subr.bf16.mxu0 0
    %979 = vmatpush1.bf16.msra.mxu0 %v705
    %980 = vmatprep.subr.bf16.mxu0 0
    %981 = vmatpush1.bf16.msra.mxu0 %v708
    %982 = vmatprep.subr.bf16.mxu0 0
    %983 = vmatpush1.bf16.msra.mxu0 %v711
    %984 = vmatprep.subr.bf16.mxu0 0
    %985 = vmatpush1.bf16.msra.mxu0 %v714
    %986 = vmatprep.subr.bf16.mxu0 0
    %987 = vmatpush1.bf16.msra.mxu0 %v717
    %988 = vmatprep.subr.bf16.mxu0 0
    %989 = vmatpush1.bf16.msra.mxu0 %v720
    %990 = vmatprep.subr.bf16.mxu0 0
    %991 = vmatpush1.bf16.msra.mxu0 %v723
    %992 = vmatprep.subr.bf16.mxu0 0
    %993 = vmatpush1.bf16.msra.mxu0 %v726
    %994 = vmatprep.subr.bf16.mxu0 0
    %995 = vmatpush1.bf16.msra.mxu0 %v729
    %996 = vmatprep.subr.bf16.mxu0 0
    %997 = vmatpush1.bf16.msra.mxu0 %v732
    %998 = vmatprep.subr.bf16.mxu0 0
    %999 = vmatpush1.bf16.msra.mxu0 %v735
    %1000 = vmatprep.subr.bf16.mxu0 0
    %1001 = vmatpush1.bf16.msra.mxu0 %v738
    %1002 = vmatprep.subr.bf16.mxu0 0
    %1003 = vmatpush1.bf16.msra.mxu0 %v741
    %1004 = vmatprep.mubr.bf16.mxu0 %v226
    %1005 = vmatmul.mubr.bf16.gmra.mrb[0].mxu0 %v225
    %v1006 = vpop.f32.mrb[0].mxu0
    %v1007 = vadd.f32 %v370, %v1006
    %v1008 = vpop.f32.mrb[0].mxu0
    %v1009 = vpop.f32.mrb[0].mxu0
    %v1010 = vadd.f32 %v370, %v1009
    %v1011 = vpop.f32.mrb[0].mxu0
    %1012 = vdwg.mxu0
    %1013 = vmatprep.subr.bf16.mxu0 0
    %1014 = vmatpush1.bf16.msra.mxu0 %v744
    %1015 = vmatprep.subr.bf16.mxu0 0
    %1016 = vmatpush1.bf16.msra.mxu0 %v747
    %1017 = vmatprep.subr.bf16.mxu0 0
    %1018 = vmatpush1.bf16.msra.mxu0 %v750
    %1019 = vmatprep.subr.bf16.mxu0 0
    %1020 = vmatpush1.bf16.msra.mxu0 %v753
    %1021 = vmatprep.subr.bf16.mxu0 0
    %1022 = vmatpush1.bf16.msra.mxu0 %v756
    %1023 = vmatprep.subr.bf16.mxu0 0
    %1024 = vmatpush1.bf16.msra.mxu0 %v759
    %1025 = vmatprep.subr.bf16.mxu0 0
    %1026 = vmatpush1.bf16.msra.mxu0 %v762
    %1027 = vmatprep.subr.bf16.mxu0 0
    %1028 = vmatpush1.bf16.msra.mxu0 %v765
    %1029 = vmatprep.subr.bf16.mxu0 0
    %1030 = vmatpush1.bf16.msra.mxu0 %v768
    %1031 = vmatprep.subr.bf16.mxu0 0
    %1032 = vmatpush1.bf16.msra.mxu0 %v771
    %1033 = vmatprep.subr.bf16.mxu0 0
    %1034 = vmatpush1.bf16.msra.mxu0 %v774
    %1035 = vmatprep.subr.bf16.mxu0 0
    %1036 = vmatpush1.bf16.msra.mxu0 %v777
    %1037 = vmatprep.subr.bf16.mxu0 0
    %1038 = vmatpush1.bf16.msra.mxu0 %v780
    %1039 = vmatprep.subr.bf16.mxu0 0
    %1040 = vmatpush1.bf16.msra.mxu0 %v783
    %1041 = vmatprep.subr.bf16.mxu0 0
    %1042 = vmatpush1.bf16.msra.mxu0 %v786
    %1043 = vmatprep.subr.bf16.mxu0 0
    %1044 = vmatpush1.bf16.msra.mxu0 %v789
    %1045 = vmatprep.mubr.bf16.mxu0 %v228
    %1046 = vmatmul.mubr.bf16.gmra.mrb[0].mxu0 %v227
    %v1047 = vpop.f32.mrb[0].mxu0
    %v1048 = vadd.f32 %v1007, %v1047
    %v1049 = vpop.f32.mrb[0].mxu0
    %v1050 = vpop.f32.mrb[0].mxu0
    %v1051 = vadd.f32 %v1010, %v1050
    %v1052 = vpop.f32.mrb[0].mxu0
    %1053 = vdwg.mxu0
    %v1054 = vmax.f32 %v964, 0.0
    %v1055 = vmax.f32 %v966, 0.0
    %v1056 = vmax.f32 %v1048, 0.0
    %v1057 = vmax.f32 %v968, 0.0
    %v1058 = vmax.f32 %v970, 0.0
    %v1059 = vmax.f32 %v1051, 0.0
    %v1060 = vpack.c.bf16 %v1057, %v1054
    %v1061 = vpack.c.bf16 %v1058, %v1055
    %v1062 = vpack.c.bf16 %v1059, %v1056
    %v1063 = vld [vmem:[#allocation7] sm:$0xf]
    %v1064 = vld [vmem:[#allocation7 + $0x4] sm:$0xf]
    %v1065 = vld [vmem:[#allocation7 + $0x8] sm:$0xf]
    %v1066 = vld [vmem:[#allocation7 + $0xc] sm:$0xf]
    %v1067 = vld [vmem:[#allocation7 + $0x10] sm:$0xf]
    %v1068 = vld [vmem:[#allocation7 + $0x14] sm:$0xf]
    %v1069 = vld [vmem:[#allocation7 + $0x18] sm:$0xf]
    %v1070 = vld [vmem:[#allocation7 + $0x1c] sm:$0xf]
    %v1071 = vld [vmem:[#allocation7 + $0x20] sm:$0xf]
    %v1072 = vld [vmem:[#allocation7 + $0x24] sm:$0xf]
    %v1073 = vld [vmem:[#allocation7 + $0x28] sm:$0xf]
    %v1074 = vld [vmem:[#allocation7 + $0x2c] sm:$0xf]
    %v1075 = vld [vmem:[#allocation7 + $0x30] sm:$0xf]
    %v1076 = vld [vmem:[#allocation7 + $0x34] sm:$0xf]
    %v1077 = vld [vmem:[#allocation7 + $0x38] sm:$0xf]
    %v1078 = vld [vmem:[#allocation7 + $0x3c] sm:$0xf]
    %v1079 = vld [vmem:[#allocation7 + $0x40] sm:$0xf]
    %v1080 = vld [vmem:[#allocation7 + $0x44] sm:$0xf]
    %v1081 = vld [vmem:[#allocation7 + $0x48] sm:$0xf]
    %v1082 = vld [vmem:[#allocation7 + $0x4c] sm:$0xf]
    %v1083 = vld [vmem:[#allocation7 + $0x50] sm:$0xf]
    %v1084 = vld [vmem:[#allocation7 + $0x54] sm:$0xf]
    %v1085 = vld [vmem:[#allocation7 + $0x58] sm:$0xf]
    %v1086 = vld [vmem:[#allocation7 + $0x5c] sm:$0xf]
    %v1087 = vld [vmem:[#allocation7 + $0x60] sm:$0xf]
    %v1088 = vld [vmem:[#allocation7 + $0x64] sm:$0xf]
    %v1089 = vld [vmem:[#allocation7 + $0x68] sm:$0xf]
    %v1090 = vld [vmem:[#allocation7 + $0x6c] sm:$0xf]
    %v1091 = vld [vmem:[#allocation7 + $0x70] sm:$0xf]
    %v1092 = vld [vmem:[#allocation7 + $0x74] sm:$0xf]
    %v1093 = vld [vmem:[#allocation7 + $0x78] sm:$0xf]
    %v1094 = vld [vmem:[#allocation7 + $0x7c] sm:$0xf]
    %v1095 = vld [vmem:[#allocation7 + $0x80] sm:$0xf]
    %v1096 = vld [vmem:[#allocation7 + $0x84] sm:$0xf]
    %v1097 = vld [vmem:[#allocation7 + $0x88] sm:$0xf]
    %v1098 = vld [vmem:[#allocation7 + $0x8c] sm:$0xf]
    %v1099 = vld [vmem:[#allocation7 + $0x90] sm:$0xf]
    %v1100 = vld [vmem:[#allocation7 + $0x94] sm:$0xf]
    %v1101 = vld [vmem:[#allocation7 + $0x98] sm:$0xf]
    %v1102 = vld [vmem:[#allocation7 + $0x9c] sm:$0xf]
    %v1103 = vld [vmem:[#allocation7 + $0xa0] sm:$0xf]
    %v1104 = vld [vmem:[#allocation7 + $0xa4] sm:$0xf]
    %v1105 = vld [vmem:[#allocation7 + $0xa8] sm:$0xf]
    %v1106 = vld [vmem:[#allocation7 + $0xac] sm:$0xf]
    %v1107 = vld [vmem:[#allocation7 + $0xb0] sm:$0xf]
    %v1108 = vld [vmem:[#allocation7 + $0xb4] sm:$0xf]
    %v1109 = vld [vmem:[#allocation7 + $0xb8] sm:$0xf]
    %v1110 = vld [vmem:[#allocation7 + $0xbc] sm:$0xf]
    %v1111 = vld [vmem:[%s6] sm:$0x1]
    %v1113 = vlaneseq
    %v1114 = vshrl.u32 %v1113, 7
    %v1115 = vsub.s32 0, %v1114
    %v1116 = vrot.slane %v1111, %v1115
    %v1166 = vunpack.c.l.b16 %v1063
    %v1167 = vunpack.c.l.b16 %v1064
    %v1168 = vunpack.c.l.b16 %v1065
    %v1169 = vunpack.c.l.b16 %v1066
    %v1170 = vunpack.c.l.b16 %v1067
    %v1171 = vunpack.c.l.b16 %v1068
    %v1172 = vunpack.c.l.b16 %v1069
    %v1173 = vunpack.c.l.b16 %v1070
    %v1174 = vunpack.c.l.b16 %v1071
    %v1175 = vunpack.c.l.b16 %v1072
    %v1176 = vunpack.c.l.b16 %v1073
    %v1177 = vunpack.c.l.b16 %v1074
    %v1178 = vunpack.c.l.b16 %v1075
    %v1179 = vunpack.c.l.b16 %v1076
    %v1180 = vunpack.c.l.b16 %v1077
    %v1181 = vunpack.c.l.b16 %v1078
    %v1182 = vunpack.c.l.b16 %v1079
    %v1183 = vunpack.c.l.b16 %v1080
    %v1184 = vunpack.c.l.b16 %v1081
    %v1185 = vunpack.c.l.b16 %v1082
    %v1186 = vunpack.c.l.b16 %v1083
    %v1187 = vunpack.c.l.b16 %v1084
    %v1188 = vunpack.c.l.b16 %v1085
    %v1189 = vunpack.c.l.b16 %v1086
    %v1190 = vunpack.c.l.b16 %v1087
    %v1191 = vunpack.c.l.b16 %v1088
    %v1192 = vunpack.c.l.b16 %v1089
    %v1193 = vunpack.c.l.b16 %v1090
    %v1194 = vunpack.c.l.b16 %v1091
    %v1195 = vunpack.c.l.b16 %v1092
    %v1196 = vunpack.c.l.b16 %v1093
    %v1197 = vunpack.c.l.b16 %v1094
    %v1198 = vunpack.c.l.b16 %v1095
    %v1199 = vunpack.c.l.b16 %v1096
    %v1200 = vunpack.c.l.b16 %v1097
    %v1201 = vunpack.c.l.b16 %v1098
    %v1202 = vunpack.c.l.b16 %v1099
    %v1203 = vunpack.c.l.b16 %v1100
    %v1204 = vunpack.c.l.b16 %v1101
    %v1205 = vunpack.c.l.b16 %v1102
    %v1206 = vunpack.c.l.b16 %v1103
    %v1207 = vunpack.c.l.b16 %v1104
    %v1208 = vunpack.c.l.b16 %v1105
    %v1209 = vunpack.c.l.b16 %v1106
    %v1210 = vunpack.c.l.b16 %v1107
    %v1211 = vunpack.c.l.b16 %v1108
    %v1212 = vunpack.c.l.b16 %v1109
    %v1213 = vunpack.c.l.b16 %v1110
    %v1214 = vpack.c.b16 %v1167, %v1166
    %v1215 = vpack.c.b16 %v1169, %v1168
    %v1216 = vpack.c.b16 %v1171, %v1170
    %v1217 = vpack.c.b16 %v1173, %v1172
    %v1218 = vpack.c.b16 %v1175, %v1174
    %v1219 = vpack.c.b16 %v1177, %v1176
    %v1220 = vpack.c.b16 %v1179, %v1178
    %v1221 = vpack.c.b16 %v1181, %v1180
    %v1222 = vpack.c.b16 %v1183, %v1182
    %v1223 = vpack.c.b16 %v1185, %v1184
    %v1224 = vpack.c.b16 %v1187, %v1186
    %v1225 = vpack.c.b16 %v1189, %v1188
    %v1226 = vpack.c.b16 %v1191, %v1190
    %v1227 = vpack.c.b16 %v1193, %v1192
    %v1228 = vpack.c.b16 %v1195, %v1194
    %v1229 = vpack.c.b16 %v1197, %v1196
    %v1230 = vpack.c.b16 %v1199, %v1198
    %v1231 = vpack.c.b16 %v1201, %v1200
    %v1232 = vpack.c.b16 %v1203, %v1202
    %v1233 = vpack.c.b16 %v1205, %v1204
    %v1234 = vpack.c.b16 %v1207, %v1206
    %v1235 = vpack.c.b16 %v1209, %v1208
    %v1236 = vpack.c.b16 %v1211, %v1210
    %v1237 = vpack.c.b16 %v1213, %v1212
    %1262 = vmatprep.subr.bf16.mxu0 0
    %1263 = vmatpush1.bf16.msra.mxu0 %v1214
    %1264 = vmatprep.subr.bf16.mxu0 0
    %1265 = vmatpush1.bf16.msra.mxu0 %v1215
    %1266 = vmatprep.subr.bf16.mxu0 0
    %1267 = vmatpush1.bf16.msra.mxu0 %v1216
    %1268 = vmatprep.subr.bf16.mxu0 0
    %1269 = vmatpush1.bf16.msra.mxu0 %v1217
    %1270 = vmatprep.subr.bf16.mxu0 0
    %1271 = vmatpush1.bf16.msra.mxu0 %v1218
    %1272 = vmatprep.subr.bf16.mxu0 0
    %1273 = vmatpush1.bf16.msra.mxu0 %v1219
    %1274 = vmatprep.subr.bf16.mxu0 0
    %1275 = vmatpush1.bf16.msra.mxu0 %v1220
    %1276 = vmatprep.subr.bf16.mxu0 0
    %1277 = vmatpush1.bf16.msra.mxu0 %v1221
    %1278 = vmatprep.subr.bf16.mxu0 0
    %1279 = vmatpush1.bf16.msra.mxu0 %v1222
    %1280 = vmatprep.subr.bf16.mxu0 0
    %1281 = vmatpush1.bf16.msra.mxu0 %v1223
    %1282 = vmatprep.subr.bf16.mxu0 0
    %1283 = vmatpush1.bf16.msra.mxu0 %v1224
    %1284 = vmatprep.subr.bf16.mxu0 0
    %1285 = vmatpush1.bf16.msra.mxu0 %v1225
    %1286 = vmatprep.subr.bf16.mxu0 0
    %1287 = vmatpush1.bf16.msra.mxu0 %v1226
    %1288 = vmatprep.subr.bf16.mxu0 0
    %1289 = vmatpush1.bf16.msra.mxu0 %v1227
    %1290 = vmatprep.subr.bf16.mxu0 0
    %1291 = vmatpush1.bf16.msra.mxu0 %v1228
    %1292 = vmatprep.subr.bf16.mxu0 0
    %1293 = vmatpush1.bf16.msra.mxu0 %v1229
    %1294 = vmatprep.mubr.bf16.mxu0 %v1061
    %1295 = vmatmul.mubr.bf16.gmra.mrb[0].mxu0 %v1060
    %v1296 = vpop.f32.mrb[0].mxu0
    %v1297 = vadd.f32 %v1116, %v1296
    %v1298 = vpop.f32.mrb[0].mxu0
    %v1299 = vpop.f32.mrb[0].mxu0
    %v1300 = vadd.f32 %v1116, %v1299
    %v1301 = vpop.f32.mrb[0].mxu0
    %1302 = vdwg.mxu0
    %1303 = vmatprep.subr.bf16.mxu0 0
    %1304 = vmatpush1.bf16.msra.mxu0 %v1230
    %1305 = vmatprep.subr.bf16.mxu0 0
    %1306 = vmatpush1.bf16.msra.mxu0 %v1231
    %1307 = vmatprep.subr.bf16.mxu0 0
    %1308 = vmatpush1.bf16.msra.mxu0 %v1232
    %1309 = vmatprep.subr.bf16.mxu0 0
    %1310 = vmatpush1.bf16.msra.mxu0 %v1233
    %1311 = vmatprep.subr.bf16.mxu0 0
    %1312 = vmatpush1.bf16.msra.mxu0 %v1234
    %1313 = vmatprep.subr.bf16.mxu0 0
    %1314 = vmatpush1.bf16.msra.mxu0 %v1235
    %1315 = vmatprep.subr.bf16.mxu0 0
    %1316 = vmatpush1.bf16.msra.mxu0 %v1236
    %1317 = vmatprep.subr.bf16.mxu0 0
    %1318 = vmatpush1.bf16.msra.mxu0 %v1237
    %1319 = vmatprep.subr.bf16.mxu0 0
    %1320 = vmatpush1.bf16.msra.mxu0 0
    %1321 = vmatprep.subr.bf16.mxu0 0
    %1322 = vmatpush1.bf16.msra.mxu0 0
    %1323 = vmatprep.subr.bf16.mxu0 0
    %1324 = vmatpush1.bf16.msra.mxu0 0
    %1325 = vmatprep.subr.bf16.mxu0 0
    %1326 = vmatpush1.bf16.msra.mxu0 0
    %1327 = vmatprep.subr.bf16.mxu0 0
    %1328 = vmatpush1.bf16.msra.mxu0 0
    %1329 = vmatprep.subr.bf16.mxu0 0
    %1330 = vmatpush1.bf16.msra.mxu0 0
    %1331 = vmatprep.subr.bf16.mxu0 0
    %1332 = vmatpush1.bf16.msra.mxu0 0
    %1333 = vmatprep.subr.bf16.mxu0 0
    %1334 = vmatpush1.bf16.msra.mxu0 0
    %1335 = vmatprep.mubr.bf16.mxu0 0
    %1336 = vmatmul.mubr.bf16.gmra.mrb[0].mxu0 %v1062
    %v1337 = vpop.f32.mrb[0].mxu0
    %v1338 = vadd.f32 %v1297, %v1337
    %v1339 = vpop.f32.mrb[0].mxu0
    %v1340 = vpop.f32.mrb[0].mxu0
    %v1341 = vadd.f32 %v1300, %v1340
    %v1342 = vpop.f32.mrb[0].mxu0
    %1343 = vdwg.mxu0
    %v1344 = vtanh.pop %v1338
    %v1345 = vtanh.pop %v1341
    %v1346 = vmul.f32 %v1344, 2.0
    %v1347 = vmul.f32 %v1345, 2.0
    %1348 = vst [vmem:[%s7] sm:$0xff] %v1346
    %1349 = vst [vmem:[%s7 + $0x8] sm:$0xff] %v1347
    // Predicated region
    $region46: #{actor_forward.1} parent=1 // pred_check
      _
    $region47: #{actor_forward.1} parent=1 // pred_check_branch
      %1351 = sbr.rel (0) target = $region49
    $region48: #{actor_forward.1} parent=1 // pred_region
      _
    $region49: #{actor_forward.1} parent=1 // pred_fallthru
      _
    // Predicated region
    $region50: #{actor_forward.1} parent=1 // pred_check
      _
    $region51: #{actor_forward.1} parent=1 // pred_check_branch
      %1353 = sbr.rel (0) target = $region53
    $region52: #{actor_forward.1} parent=1 // pred_region
      _
    $region53: #{actor_forward.1} parent=1 // pred_fallthru
      _
    %1354 = vsyncpa [#allocation3], 1
    %1355 = vsyncpa [#allocation5], 1
    %1356 = vsyncpa [#allocation8], 1

</llo_original>
